<compile_context>
chip_gen: v7x
topology: tpu7x:2x2x1
jax: 0.10.0
libtpu: 0.0.40
codegen_flags: <defaults>
</compile_context>

<pallas_src>
import functools

import jax
import jax.numpy as jnp
from jax.experimental import pallas as pl
from jax.experimental.pallas import tpu as pltpu


def _round_up(x: int, m: int) -> int:
    return ((x + m - 1) // m) * m


def _pick_tile_k(d: int, max_tile_k: int = 512) -> int:
    # Contraction tile: whole D when small (block == full dim), else a
    # 128-multiple tile; the ragged tail is masked in-kernel.
    if d <= max_tile_k:
        return d
    return max_tile_k


def _pick_tile_b(b: int, target: int = 512) -> int:
    # Batch tile: whole batch when small; otherwise a multiple of 8 aimed at
    # `target`, sized so there are at least 2 tiles (keeps both v7x TCs busy)
    # and the tail padding is minimal.
    if b <= 128:
        return b
    tb = min(target, _round_up((b + 1) // 2, 8))
    return max(8, (tb // 8) * 8)


def _ssl_kernel(obs_ref, w_enc_ref, b_enc_ref, w_pt_ref, b_pt_ref,
                enc_ref, proj_ref, loss_ref,
                *, batch, d, tile_k, p_pad, d_ragged, compute_dtype):
    """grid = (batch_tiles, k_tiles); k (encoder contraction over D) is last.

    The f32 `enc` output block is the reduction accumulator (its block index is
    constant along k, so it stays resident in VMEM across the reduction).
    """
    k = pl.program_id(1)
    nk = pl.num_programs(1)
    # NOTE: program_id/num_programs must NOT be called inside pl.when bodies
    # (lax.cond branches) -- hoist everything that needs them to top level.
    row_base = pl.program_id(0) * enc_ref.shape[0]

    # ---- init accumulator at the start of the D reduction -------------------
    @pl.when(k == 0)
    def _():
        enc_ref[...] = jnp.zeros_like(enc_ref)

    # ---- streamed encoder matmul: enc += x_tile @ w_enc_tile (MXU, bf16) ----
    x = obs_ref[...]
    if d_ragged:
        # Last K tile is partial: zero the out-of-range columns (Pallas does
        # not guarantee zeros in partial input blocks).
        col = k * tile_k + jax.lax.broadcasted_iota(jnp.int32, x.shape, 1)
        x = jnp.where(col < d, x, jnp.zeros_like(x))
    enc_ref[...] += jnp.dot(x.astype(compute_dtype), w_enc_ref[...],
                            preferred_element_type=jnp.float32)

    # ---- finalize on the last K step ----------------------------------------
    @pl.when(k == nk - 1)
    def _():
        # encoder bias + ReLU (bias added once, not per K step)
        enc = jnp.maximum(enc_ref[...] + b_enc_ref[...], 0.0)   # [TB, E_pad] f32
        enc_ref[...] = enc

        # fused online-projector + EMA-target-projector matmul: [TB, 2*P_pad]
        pt = jnp.dot(enc.astype(compute_dtype), w_pt_ref[...],
                     preferred_element_type=jnp.float32) + b_pt_ref[...]
        proj = pt[:, :p_pad]                                     # online branch
        tgt = pt[:, p_pad:]                                      # EMA target branch
        # TODO(synk): BYOL stop-gradient on `tgt` is a backward-pass concern;
        # this kernel implements forward only.
        proj_ref[...] = proj.astype(proj_ref.dtype)

        # BYOL loss rows: 2 - 2 * cos(proj, tgt)  (all f32 VPU/EUP math)
        eps = jnp.float32(1e-12)
        p_n = proj * jax.lax.rsqrt(jnp.sum(proj * proj, -1, keepdims=True) + eps)
        t_n = tgt * jax.lax.rsqrt(jnp.sum(tgt * tgt, -1, keepdims=True) + eps)
        cos = jnp.sum(p_n * t_n, axis=-1, keepdims=True)         # [TB, 1]
        row_loss = 2.0 - 2.0 * cos

        # mask rows that are batch padding (ragged last batch tile)
        row = row_base + jax.lax.broadcasted_iota(jnp.int32, row_loss.shape, 0)
        row_loss = jnp.where(row < batch, row_loss, 0.0)

        # per-batch-tile partial sum, written as a fully (8,128)-dense block
        loss_ref[...] = jnp.broadcast_to(jnp.sum(row_loss), loss_ref.shape)


def prepare_ssl_params(params, *, compute_dtype=jnp.bfloat16, max_tile_k=512):
    """One-time padding / fusion of SSL parameters.

    Call once and cache alongside the params; doing this per forward step would
    add a full extra HBM pass over the weights (see perf review).
    """
    w_enc, b_enc, w_proj, b_proj, w_tgt, b_tgt = params
    d, e = w_enc.shape
    p = w_proj.shape[1]
    e_pad = _round_up(e, 128)
    p_pad = _round_up(p, 128)
    tile_k = _pick_tile_k(d, max_tile_k)
    d_pad = _round_up(d, tile_k)   # real zero rows -> safe against garbage obs tails

    w_enc_p = (jnp.zeros((d_pad, e_pad), compute_dtype)
               .at[:d, :e].set(w_enc.astype(compute_dtype)))
    b_enc_p = (jnp.zeros((1, e_pad), jnp.float32)
               .at[:, :e].set(b_enc.reshape(1, e).astype(jnp.float32)))
    # fused [online projector | EMA target projector] -> single MXU matmul
    w_pt = (jnp.zeros((e_pad, 2 * p_pad), compute_dtype)
            .at[:e, :p].set(w_proj.astype(compute_dtype))
            .at[:e, p_pad:p_pad + p].set(w_tgt.astype(compute_dtype)))
    b_pt = (jnp.zeros((1, 2 * p_pad), jnp.float32)
            .at[:, :p].set(b_proj.reshape(1, p).astype(jnp.float32))
            .at[:, p_pad:p_pad + p].set(b_tgt.reshape(1, p).astype(jnp.float32)))
    return {
        "w_enc": w_enc_p, "b_enc": b_enc_p, "w_pt": w_pt, "b_pt": b_pt,
        "D": d, "E": e, "P": p, "E_pad": e_pad, "P_pad": p_pad,
        "tile_k": tile_k, "compute_dtype": compute_dtype,
    }


def ssl_forward(obs, prep, *, tile_b=None):
    """Concrete AbstractSSL.forward -> (obs_enc, obs_proj, loss, loss_components)."""
    b = obs.shape[0]
    obs_flat = obs.reshape(b, -1)     # native dtype, NO wrapper-side pad/copy
    d = prep["D"]
    assert obs_flat.shape[1] == d
    e, p = prep["E"], prep["P"]
    e_pad, p_pad = prep["E_pad"], prep["P_pad"]
    tile_k = prep["tile_k"]
    compute_dtype = prep["compute_dtype"]

    if tile_b is None:
        tile_b = _pick_tile_b(b)
    nb = -(-b // tile_b)
    nk = -(-d // tile_k)
    d_ragged = (d % tile_k) != 0

    kernel = functools.partial(
        _ssl_kernel, batch=b, d=d, tile_k=tile_k, p_pad=p_pad,
        d_ragged=d_ragged, compute_dtype=compute_dtype)

    enc_p, proj_p, loss_parts = pl.pallas_call(
        kernel,
        out_shape=(
            jax.ShapeDtypeStruct((b, e_pad), jnp.float32),
            jax.ShapeDtypeStruct((b, p_pad), jnp.float32),
            jax.ShapeDtypeStruct((nb, 8, 128), jnp.float32),
        ),
        grid=(nb, nk),
        in_specs=[
            # TODO(synk): pipeline_mode=pl.Buffered(3) on obs would hide the
            # finalize-step burst; omitted for portability across jax versions.
            pl.BlockSpec((tile_b, tile_k), lambda i, k: (i, k)),     # obs
            pl.BlockSpec((tile_k, e_pad), lambda i, k: (k, 0)),      # w_enc
            pl.BlockSpec((1, e_pad), lambda i, k: (0, 0)),           # b_enc
            pl.BlockSpec((e_pad, 2 * p_pad), lambda i, k: (0, 0)),   # w_pt (fused)
            pl.BlockSpec((1, 2 * p_pad), lambda i, k: (0, 0)),       # b_pt (fused)
        ],
        out_specs=(
            pl.BlockSpec((tile_b, e_pad), lambda i, k: (i, 0)),      # enc (accumulator)
            pl.BlockSpec((tile_b, p_pad), lambda i, k: (i, 0)),      # proj
            pl.BlockSpec((1, 8, 128), lambda i, k: (i, 0, 0)),       # loss partials
        ),
        compiler_params=pltpu.CompilerParams(
            dimension_semantics=("parallel", "arbitrary"),
            vmem_limit_bytes=48 * 1024 * 1024,   # fits v7x's 64 MiB physical VMEM
        ),
    )(obs_flat, prep["w_enc"], prep["b_enc"], prep["w_pt"], prep["b_pt"])

    obs_enc = enc_p[:, :e]
    obs_proj = proj_p[:, :p]
    loss = jnp.sum(loss_parts[:, 0, 0]) / jnp.float32(b)
    return obs_enc, obs_proj, loss, {"byol_loss": loss}


def init_params(key, D, E, P):
    """Deterministic parameter init (encoder, projector, EMA target projector)."""
    k1, k2, k3 = jax.random.split(key, 3)
    w_enc = jax.random.normal(k1, (D, E), jnp.float32) / jnp.sqrt(D)
    b_enc = jnp.zeros((1, E), jnp.float32)
    w_proj = jax.random.normal(k2, (E, P), jnp.float32) / jnp.sqrt(E)
    b_proj = jnp.zeros((1, P), jnp.float32)
    # target projector = slightly perturbed copy (EMA state); deterministic.
    w_tgt = w_proj + 0.01 * (jax.random.normal(k3, (E, P), jnp.float32) / jnp.sqrt(E))
    b_tgt = jnp.zeros((1, P), jnp.float32)
    return (w_enc, b_enc, w_proj, b_proj, w_tgt, b_tgt)


def _reference_forward(obs, params, compute_dtype=jnp.bfloat16):
    """Pure-JAX reference with matched matmul precision (bf16 in, f32 acc)."""
    w_enc, b_enc, w_proj, b_proj, w_tgt, b_tgt = params
    B = obs.shape[0]
    x = obs.reshape(B, -1)
    enc = jnp.maximum(
        jnp.dot(x.astype(compute_dtype), w_enc.astype(compute_dtype),
                preferred_element_type=jnp.float32) + b_enc, 0.0)
    enc_c = enc.astype(compute_dtype)
    proj = jnp.dot(enc_c, w_proj.astype(compute_dtype),
                   preferred_element_type=jnp.float32) + b_proj
    tgt = jnp.dot(enc_c, w_tgt.astype(compute_dtype),
                  preferred_element_type=jnp.float32) + b_tgt
    eps = 1e-12
    p_n = proj * jax.lax.rsqrt(jnp.sum(proj * proj, -1, keepdims=True) + eps)
    t_n = tgt * jax.lax.rsqrt(jnp.sum(tgt * tgt, -1, keepdims=True) + eps)
    loss = jnp.mean(2.0 - 2.0 * jnp.sum(p_n * t_n, -1))
    return enc, proj, loss


# TODO(synk): AbstractSSL.step() (optimizer step / EMA update / queue update) is
# training-state mutation with no forward-pass compute; not implemented as a kernel.

if __name__ == "__main__":
    key = jax.random.PRNGKey(0)
    k_obs, k_par = jax.random.split(key)

    B, C, H, W = 2, 4, 16, 16            # NCHW, matches PyTorch convention
    E, P = 64, 32
    D = C * H * W

    obs = jax.random.normal(k_obs, (B, C, H, W), jnp.float32)
    params = init_params(k_par, D, E, P)
    prep = prepare_ssl_params(params)    # one-time; cache alongside params

    obs_enc, obs_proj, loss, loss_components = ssl_forward(obs, prep)
    jax.block_until_ready((obs_enc, obs_proj, loss))

    assert obs_enc.shape == (B, E)
    assert obs_proj.shape == (B, P)
    assert loss.shape == ()
    assert "byol_loss" in loss_components

    ref_enc, ref_proj, ref_loss = _reference_forward(obs, params)
    assert jnp.allclose(obs_enc, ref_enc, atol=2e-2, rtol=2e-2)
    assert jnp.allclose(obs_proj, ref_proj, atol=2e-2, rtol=2e-2)
    assert jnp.allclose(loss, ref_loss, atol=2e-2)
    print("KERNEL_OK")
</pallas_src>

<mosaic_0001>
module attributes {stable_mosaic.version = 11 : i64} {
  func.func @_ssl_kernel(%arg0: i32, %arg1: i32, %arg2: memref<2x512xf32, #tpu.memory_space<vmem>>, %arg3: memref<512x128xbf16, #tpu.memory_space<vmem>>, %arg4: memref<1x128xf32, #tpu.memory_space<vmem>>, %arg5: memref<128x256xbf16, #tpu.memory_space<vmem>>, %arg6: memref<1x256xf32, #tpu.memory_space<vmem>>, %arg7: memref<2x128xf32, #tpu.memory_space<vmem>>, %arg8: memref<2x128xf32, #tpu.memory_space<vmem>>, %arg9: memref<1x8x128xf32, #tpu.memory_space<vmem>>) attributes {dimension_semantics = [#tpu.dimension_semantics<parallel>, #tpu.dimension_semantics<arbitrary>], iteration_bounds = array<i64: 1, 2>, scalar_prefetch = 0 : i64, scratch_operands = 0 : i64, tpu.core_type = #tpu.core_type<tc>, window_params = [{transform_indices = @transform_0, window_bounds = array<i64: 2, 512>}, {transform_indices = @transform_1, window_bounds = array<i64: 512, 128>}, {pipeline_mode = #tpu.pipeline_mode<synchronous>, transform_indices = @transform_2, window_bounds = array<i64: 1, 128>}, {pipeline_mode = #tpu.pipeline_mode<synchronous>, transform_indices = @transform_3, window_bounds = array<i64: 128, 256>}, {pipeline_mode = #tpu.pipeline_mode<synchronous>, transform_indices = @transform_4, window_bounds = array<i64: 1, 256>}, {transform_indices = @transform_5, window_bounds = array<i64: 2, 128>}, {transform_indices = @transform_6, window_bounds = array<i64: 2, 128>}, {transform_indices = @transform_7, window_bounds = array<i64: 1, 8, 128>}]} {
    %c2_i32 = arith.constant 2 : i32
    %0 = arith.muli %arg0, %c2_i32 : i32
    %c0_i32 = arith.constant 0 : i32
    %1 = arith.cmpi eq, %arg1, %c0_i32 : i32
    %2 = arith.extui %1 : i1 to i32
    %c0_i32_0 = arith.constant 0 : i32
    %3 = arith.cmpi ne, %2, %c0_i32_0 : i32
    scf.if %3 {
      %cst_9 = arith.constant 0.000000e+00 : f32
      %14 = vector.broadcast %cst_9 : f32 to vector<2x128xf32>
      %c0_10 = arith.constant 0 : index
      %c0_11 = arith.constant 0 : index
      %15 = vector.load %arg7[%c0_10, %c0_11] : memref<2x128xf32, #tpu.memory_space<vmem>>, vector<2x128xf32>
      tpu.vector_store %arg7[%c0_10, %c0_11], %14 {strides = array<i32>} : memref<2x128xf32, #tpu.memory_space<vmem>>, vector<2x128xf32>,
    } else {
    }
    %c0 = arith.constant 0 : index
    %c0_1 = arith.constant 0 : index
    %4 = vector.load %arg2[%c0, %c0_1] : memref<2x512xf32, #tpu.memory_space<vmem>>, vector<2x512xf32>
    %c0_2 = arith.constant 0 : index
    %c0_3 = arith.constant 0 : index
    %5 = vector.load %arg7[%c0_2, %c0_3] : memref<2x128xf32, #tpu.memory_space<vmem>>, vector<2x128xf32>
    %6 = arith.truncf %4 : vector<2x512xf32> to vector<2x512xbf16>
    %c0_4 = arith.constant 0 : index
    %c0_5 = arith.constant 0 : index
    %7 = vector.load %arg3[%c0_4, %c0_5] : memref<512x128xbf16, #tpu.memory_space<vmem>>, vector<512x128xbf16>
    %cst = arith.constant dense<0.000000e+00> : vector<2x128xf32>
    %8 = tpu.matmul %6, %7, %cst {dimension_numbers = #tpu.dot_dimension_numbers<[1], [0], [0], [1], [0, 0, 1, 1], [], []>} : vector<2x512xbf16>, vector<512x128xbf16>, vector<2x128xf32> -> vector<2x128xf32>
    %9 = arith.addf %5, %8 : vector<2x128xf32>
    %c0_6 = arith.constant 0 : index
    %c0_7 = arith.constant 0 : index
    %10 = vector.load %arg7[%c0_6, %c0_7] : memref<2x128xf32, #tpu.memory_space<vmem>>, vector<2x128xf32>
    tpu.vector_store %arg7[%c0_6, %c0_7], %9 {strides = array<i32>} : memref<2x128xf32, #tpu.memory_space<vmem>>, vector<2x128xf32>,
    %c1_i32 = arith.constant 1 : i32
    %11 = arith.cmpi eq, %arg1, %c1_i32 : i32
    %12 = arith.extui %11 : i1 to i32
    %c0_i32_8 = arith.constant 0 : i32
    %13 = arith.cmpi ne, %12, %c0_i32_8 : i32
    scf.if %13 {
      %c0_9 = arith.constant 0 : index
      %c0_10 = arith.constant 0 : index
      %14 = vector.load %arg7[%c0_9, %c0_10] : memref<2x128xf32, #tpu.memory_space<vmem>>, vector<2x128xf32>
      %c0_11 = arith.constant 0 : index
      %c0_12 = arith.constant 0 : index
      %15 = vector.load %arg4[%c0_11, %c0_12] : memref<1x128xf32, #tpu.memory_space<vmem>>, vector<1x128xf32>
      %16 = vector.broadcast %15 : vector<1x128xf32> to vector<2x128xf32>
      %17 = arith.addf %14, %16 : vector<2x128xf32>
      %cst_13 = arith.constant 0.000000e+00 : f32
      %18 = vector.broadcast %cst_13 : f32 to vector<2x128xf32>
      %19 = arith.maximumf %17, %18 : vector<2x128xf32>
      %c0_14 = arith.constant 0 : index
      %c0_15 = arith.constant 0 : index
      %20 = vector.load %arg7[%c0_14, %c0_15] : memref<2x128xf32, #tpu.memory_space<vmem>>, vector<2x128xf32>
      tpu.vector_store %arg7[%c0_14, %c0_15], %19 {strides = array<i32>} : memref<2x128xf32, #tpu.memory_space<vmem>>, vector<2x128xf32>,
      %21 = arith.truncf %19 : vector<2x128xf32> to vector<2x128xbf16>
      %c0_16 = arith.constant 0 : index
      %c0_17 = arith.constant 0 : index
      %22 = vector.load %arg5[%c0_16, %c0_17] : memref<128x256xbf16, #tpu.memory_space<vmem>>, vector<128x256xbf16>
      %cst_18 = arith.constant dense<0.000000e+00> : vector<2x256xf32>
      %23 = tpu.matmul %21, %22, %cst_18 {dimension_numbers = #tpu.dot_dimension_numbers<[1], [0], [0], [1], [0, 0, 1, 1], [], []>} : vector<2x128xbf16>, vector<128x256xbf16>, vector<2x256xf32> -> vector<2x256xf32>
      %c0_19 = arith.constant 0 : index
      %c0_20 = arith.constant 0 : index
      %24 = vector.load %arg6[%c0_19, %c0_20] : memref<1x256xf32, #tpu.memory_space<vmem>>, vector<1x256xf32>
      %25 = vector.broadcast %24 : vector<1x256xf32> to vector<2x256xf32>
      %26 = arith.addf %23, %25 : vector<2x256xf32>
      %27 = vector.extract_strided_slice %26 {offsets = [0, 0], sizes = [2, 128], strides = [1, 1]} : vector<2x256xf32> to vector<2x128xf32>
      %28 = vector.extract_strided_slice %26 {offsets = [0, 128], sizes = [2, 128], strides = [1, 1]} : vector<2x256xf32> to vector<2x128xf32>
      %c0_21 = arith.constant 0 : index
      %c0_22 = arith.constant 0 : index
      %29 = vector.load %arg8[%c0_21, %c0_22] : memref<2x128xf32, #tpu.memory_space<vmem>>, vector<2x128xf32>
      tpu.vector_store %arg8[%c0_21, %c0_22], %27 {strides = array<i32>} : memref<2x128xf32, #tpu.memory_space<vmem>>, vector<2x128xf32>,
      %30 = arith.mulf %27, %27 : vector<2x128xf32>
      %cst_23 = arith.constant dense<0.000000e+00> : vector<2xf32>
      %31 = vector.multi_reduction <add>, %30, %cst_23 [1] : vector<2x128xf32> to vector<2xf32>
      %32 = vector.shape_cast %31 : vector<2xf32> to vector<2x1xf32>
      %cst_24 = arith.constant 9.99999996E-13 : f32
      %33 = vector.broadcast %cst_24 : f32 to vector<2x1xf32>
      %34 = arith.addf %32, %33 : vector<2x1xf32>
      %35 = math.rsqrt %34 : vector<2x1xf32>
      %36 = vector.broadcast %35 : vector<2x1xf32> to vector<2x128xf32>
      %37 = arith.mulf %27, %36 : vector<2x128xf32>
      %38 = arith.mulf %28, %28 : vector<2x128xf32>
      %cst_25 = arith.constant dense<0.000000e+00> : vector<2xf32>
      %39 = vector.multi_reduction <add>, %38, %cst_25 [1] : vector<2x128xf32> to vector<2xf32>
      %40 = vector.shape_cast %39 : vector<2xf32> to vector<2x1xf32>
      %cst_26 = arith.constant 9.99999996E-13 : f32
      %41 = vector.broadcast %cst_26 : f32 to vector<2x1xf32>
      %42 = arith.addf %40, %41 : vector<2x1xf32>
      %43 = math.rsqrt %42 : vector<2x1xf32>
      %44 = vector.broadcast %43 : vector<2x1xf32> to vector<2x128xf32>
      %45 = arith.mulf %28, %44 : vector<2x128xf32>
      %46 = arith.mulf %37, %45 : vector<2x128xf32>
      %cst_27 = arith.constant dense<0.000000e+00> : vector<2xf32>
      %47 = vector.multi_reduction <add>, %46, %cst_27 [1] : vector<2x128xf32> to vector<2xf32>
      %48 = vector.shape_cast %47 : vector<2xf32> to vector<2x1xf32>
      %cst_28 = arith.constant 2.000000e+00 : f32
      %49 = vector.broadcast %cst_28 : f32 to vector<2x1xf32>
      %50 = arith.mulf %49, %48 : vector<2x1xf32>
      %cst_29 = arith.constant 2.000000e+00 : f32
      %51 = vector.broadcast %cst_29 : f32 to vector<2x1xf32>
      %52 = arith.subf %51, %50 : vector<2x1xf32>
      %53 = tpu.iota {dimensions = array<i32: 0>} : vector<2x1xi32>
      %54 = vector.broadcast %0 : i32 to vector<2x1xi32>
      %55 = arith.addi %54, %53 : vector<2x1xi32>
      %c2_i32_30 = arith.constant 2 : i32
      %56 = vector.broadcast %c2_i32_30 : i32 to vector<2x1xi32>
      %57 = arith.cmpi slt, %55, %56 : vector<2x1xi32>
      %cst_31 = arith.constant 0.000000e+00 : f32
      %58 = vector.broadcast %cst_31 : f32 to vector<2x1xf32>
      %59 = arith.select %57, %52, %58 : vector<2x1xi1>, vector<2x1xf32>
      %60 = vector.shape_cast %59 : vector<2x1xf32> to vector<1x2x1xf32>
      %cst_32 = arith.constant dense<0.000000e+00> : vector<1xf32>
      %61 = vector.multi_reduction <add>, %60, %cst_32 [1, 2] : vector<1x2x1xf32> to vector<1xf32>
      %62 = vector.shape_cast %61 : vector<1xf32> to vector<1x1x1xf32>
      %63 = vector.extract %62[0, 0, 0] : f32 from vector<1x1x1xf32>
      %64 = vector.broadcast %63 : f32 to vector<1x8x128xf32>
      %c0_33 = arith.constant 0 : index
      %c0_34 = arith.constant 0 : index
      %c0_35 = arith.constant 0 : index
      %65 = vector.load %arg9[%c0_33, %c0_34, %c0_35] : memref<1x8x128xf32, #tpu.memory_space<vmem>>, vector<1x8x128xf32>
      tpu.vector_store %arg9[%c0_33, %c0_34, %c0_35], %64 {strides = array<i32>} : memref<1x8x128xf32, #tpu.memory_space<vmem>>, vector<1x8x128xf32>,
    } else {
    }
    return
  }
  func.func @transform_0(%arg0: i32, %arg1: i32) -> (i32, i32) {
    %c0_i32 = arith.constant 0 : i32
    return %arg0, %arg1 : i32, i32
  }
  func.func @transform_1(%arg0: i32, %arg1: i32) -> (i32, i32) {
    %c0_i32 = arith.constant 0 : i32
    %c0_i32_0 = arith.constant 0 : i32
    return %arg1, %c0_i32 : i32, i32
  }
  func.func @transform_2(%arg0: i32, %arg1: i32) -> (i32, i32) {
    %c0_i32 = arith.constant 0 : i32
    %c0_i32_0 = arith.constant 0 : i32
    %c0_i32_1 = arith.constant 0 : i32
    return %c0_i32, %c0_i32_0 : i32, i32
  }
  func.func @transform_3(%arg0: i32, %arg1: i32) -> (i32, i32) {
    %c0_i32 = arith.constant 0 : i32
    %c0_i32_0 = arith.constant 0 : i32
    %c0_i32_1 = arith.constant 0 : i32
    return %c0_i32, %c0_i32_0 : i32, i32
  }
  func.func @transform_4(%arg0: i32, %arg1: i32) -> (i32, i32) {
    %c0_i32 = arith.constant 0 : i32
    %c0_i32_0 = arith.constant 0 : i32
    %c0_i32_1 = arith.constant 0 : i32
    return %c0_i32, %c0_i32_0 : i32, i32
  }
  func.func @transform_5(%arg0: i32, %arg1: i32) -> (i32, i32) {
    %c0_i32 = arith.constant 0 : i32
    %c0_i32_0 = arith.constant 0 : i32
    return %arg0, %c0_i32 : i32, i32
  }
  func.func @transform_6(%arg0: i32, %arg1: i32) -> (i32, i32) {
    %c0_i32 = arith.constant 0 : i32
    %c0_i32_0 = arith.constant 0 : i32
    return %arg0, %c0_i32 : i32, i32
  }
  func.func @transform_7(%arg0: i32, %arg1: i32) -> (i32, i32, i32) {
    %c0_i32 = arith.constant 0 : i32
    %c0_i32_0 = arith.constant 0 : i32
    %c0_i32_1 = arith.constant 0 : i32
    return %arg0, %c0_i32, %c0_i32_0 : i32, i32, i32
  }
}

</mosaic_0001>

<llo_original>
// kernel: tpu_custom_call.1
$region0: #{tpu_custom_call.1}
  #allocation0 [shape = 'u32[]', space=smem, size = 0x4, offset = 0x4, fixed_abs, tag = 'smem constant byte address 0x4 - core index']
  #allocation1 [shape = 'u32[144,128]{1,0:T(1,128)}', space=vmem, size = 0x12000, scoped, tag = 'internal scratch']
  %s0 = inlined_call_operand.hbm [shape: f32[2,1024], index: 0, kind: input, shape index: {}]
  %s1 = inlined_call_operand.hbm [shape: bf16[1024,128], index: 1, kind: input, shape index: {}]
  %s2 = inlined_call_operand.vmem [shape: f32[1,128], index: 2, kind: input, shape index: {}]
  %s3 = inlined_call_operand.hbm [shape: bf16[128,256], index: 3, kind: input, shape index: {}]
  %s4 = inlined_call_operand.vmem [shape: f32[1,256], index: 4, kind: input, shape index: {}]
  %s5 = inlined_call_operand.hbm [shape: f32[2,128], index: 5, kind: output, shape index: {0}]
  %s6 = inlined_call_operand.hbm [shape: f32[2,128], index: 6, kind: output, shape index: {1}]
  %s7 = inlined_call_operand.hbm [shape: f32[1,8,128], index: 7, kind: output, shape index: {2}]
  %8 = xla_tuple %s5, %s6, %s7
  %s9 = sld [smem:[#allocation0]]
  $region89: #{tpu_custom_call.1} parent=0
    _
  %s11 = ssub.s32 1, %s9
  %s12 = scalar_select 0, %s11, %s9
  $region1: #{tpu_custom_call.1} parent=0
    #allocation2 [shape = 'u8[8192]{0}', space=vmem, size = 0x2000, scoped, tag = 'input window, operand 0']
    #allocation3 [shape = 's32[2]{0}', space=sflag, size = 0x8, scoped, tag = 'scoped memory for tpu_custom_call.1']
    #allocation4 [shape = 's32[2]{0}', space=sflag, size = 0x8, scoped, tag = 'scoped memory for tpu_custom_call.1']
    #allocation5 [shape = 'u8[262144]{0}', space=vmem, size = 0x40000, scoped, tag = 'input window, operand 1']
    #allocation6 [shape = 's32[2]{0}', space=sflag, size = 0x8, scoped, tag = 'scoped memory for tpu_custom_call.1']
    #allocation7 [shape = 'u8[65536]{0}', space=vmem, size = 0x10000, scoped, tag = 'input window, operand 3, single buffered']
    #allocation8 [shape = 'u8[1024]{0}', space=vmem, size = 0x400, scoped, tag = 'output window, operand 0, single buffered']
    #allocation9 [shape = 'u8[1024]{0}', space=vmem, size = 0x400, scoped, tag = 'output window, operand 1, single buffered']
    #allocation10 [shape = 's32[1]{0}', space=sflag, size = 0x4, scoped, tag = 'scoped memory for tpu_custom_call.1']
    #allocation11 [shape = 'u8[4096]{0}', space=vmem, size = 0x1000, scoped, tag = 'output window, operand 2, single buffered']
    %13 = vsyncpa [#allocation3], 0
    %s14 = scalar_lea.sflag [#allocation3], 1
    %15 = vsyncpa %s14, 0
    %16 = vsyncpa [#allocation6], 0
    %s17 = scalar_lea.sflag [#allocation6], 1
    %18 = vsyncpa %s17, 0
    %19 = vsyncpa [#allocation4], 0
    %20 = vsyncpa [#allocation10], 0
    loop: start=0, step=1, limit=4
    $region2: #{tpu_custom_call.1} parent=1 // loop_pre_header
      _
    $region3: #{tpu_custom_call.1} parent=1 // loop_header
      %s22 = sphi 0, %s26
      %p23 = scmp.ge.s32.totalorder %s22, 4
      %s29 = sphi 0, %s41
      %s30 = sphi 0, %s37
      %s31 = sphi 0, %s29
      %s32 = sphi 0, %s30
      %s33 = sphi 0, %s31
      %s34 = sphi 0, %s32
      %s46 = sphi 0, %s48
      %s49 = sphi 0, %s46
      %s50 = sphi 0, %s49
      %s66 = sphi 0, %s50
      %s72 = sphi 0, %s74
      %s75 = sphi 0, %s72
      %s76 = sphi 0, %s75
      %s92 = sphi 0, %s76
      %s96 = sphi 0, %s96
      %s98 = sphi 0, %s96
      %s99 = sphi 0, %s98
      %s113 = sphi 0, %s99
      %s117 = sphi 0, %s117
      %s119 = sphi 0, %s117
      %s120 = sphi 0, %s119
      %s134 = sphi 0, %s120
      %s138 = sphi 0, %s138
      %s140 = sphi 0, %s138
      %s141 = sphi 0, %s140
      %s155 = sphi 0, %s141
      %s161 = sphi 0, %s163
      %s164 = sphi 0, %s161
      %s165 = sphi 0, %s164
      %s181 = sphi 0, %s165
      %s187 = sphi 0, %s189
      %s190 = sphi 0, %s187
      %s191 = sphi 0, %s190
      %s207 = sphi 0, %s191
      %s213 = sphi 0, %s215
      %s216 = sphi 0, %s213
      %s217 = sphi 0, %s216
      %s233 = sphi 0, %s217
    $region4: #{tpu_custom_call.1} parent=1 // loop_header_branch
      %25 = sbr.rel (%p23) target = $region8
    $region5: #{tpu_custom_call.1} parent=1 // loop_body
      %s27 = ssub.s32 %s22, 1
      %s28 = ssub.s32 %s22, 2
      %s35 = sadd.s32 1, %s30
      %p36 = scmp.ge.s32.totalorder %s35, 2
      %s37 = scalar_select %p36, 0, %s35
      %s38 = sadd.s32 1, %s29
      %s39 = scalar_select %p36, %s38, %s29
      %p40 = scmp.ge.s32.totalorder %s39, 1
      %s41 = scalar_select %p40, 0, %s39
      %s42 = ssub.s32 %s29, %s41
      %s43 = ssub.s32 %s30, %s37
      %s44 = sor.u32 %s42, %s43
      %p45 = scmp.eq.s32.totalorder %s44, 0
      %s47 = sadd.s32 %s46, 1
      %s48 = scalar_select %p45, %s46, %s47
      %p51 = pneg %p45
      %p52 = scmp.eq.s32.totalorder %s22, 1
      %p53 = por %p51, %p52
      %p54 = scmp.ne.s32.totalorder %s46, %s49
      %p55 = scmp.eq.s32.totalorder %s22, 0
      %p56 = por %p54, %p55
      %p57 = scmp.ne.s32.totalorder %s46, %s49
      %p58 = scmp.eq.s32.totalorder %s27, 1
      %p59 = por %p57, %p58
      %p60 = scmp.ne.s32.totalorder %s49, %s50
      %p61 = scmp.eq.s32.totalorder %s27, 0
      %p62 = por %p60, %p61
      %p63 = scmp.ne.s32.totalorder %s49, %s50
      %p64 = scmp.eq.s32.totalorder %s28, 1
      %p65 = por %p63, %p64
      %p67 = scmp.ne.s32.totalorder %s50, %s66
      %p68 = scmp.eq.s32.totalorder %s28, 0
      %p69 = por %p67, %p68
      %s70 = ssub.s32 %s30, %s37
      %p71 = scmp.eq.s32.totalorder %s70, 0
      %s73 = sadd.s32 %s72, 1
      %s74 = scalar_select %p71, %s72, %s73
      %p77 = pneg %p71
      %p78 = scmp.eq.s32.totalorder %s22, 1
      %p79 = por %p77, %p78
      %p80 = scmp.ne.s32.totalorder %s72, %s75
      %p81 = scmp.eq.s32.totalorder %s22, 0
      %p82 = por %p80, %p81
      %p83 = scmp.ne.s32.totalorder %s72, %s75
      %p84 = scmp.eq.s32.totalorder %s27, 1
      %p85 = por %p83, %p84
      %p86 = scmp.ne.s32.totalorder %s75, %s76
      %p87 = scmp.eq.s32.totalorder %s27, 0
      %p88 = por %p86, %p87
      %p89 = scmp.ne.s32.totalorder %s75, %s76
      %p90 = scmp.eq.s32.totalorder %s28, 1
      %p91 = por %p89, %p90
      %p93 = scmp.ne.s32.totalorder %s76, %s92
      %p94 = scmp.eq.s32.totalorder %s28, 0
      %p95 = por %p93, %p94
      %s97 = sadd.s32 %s96, 1
      %p100 = scmp.eq.s32.totalorder %s22, 1
      %p101 = scmp.ne.s32.totalorder %s96, %s98
      %p102 = scmp.eq.s32.totalorder %s22, 0
      %p103 = por %p101, %p102
      %p104 = scmp.ne.s32.totalorder %s96, %s98
      %p105 = scmp.eq.s32.totalorder %s27, 1
      %p106 = por %p104, %p105
      %p107 = scmp.ne.s32.totalorder %s98, %s99
      %p108 = scmp.eq.s32.totalorder %s27, 0
      %p109 = por %p107, %p108
      %p110 = scmp.ne.s32.totalorder %s98, %s99
      %p111 = scmp.eq.s32.totalorder %s28, 1
      %p112 = por %p110, %p111
      %p114 = scmp.ne.s32.totalorder %s99, %s113
      %p115 = scmp.eq.s32.totalorder %s28, 0
      %p116 = por %p114, %p115
      %s118 = sadd.s32 %s117, 1
      %p121 = scmp.eq.s32.totalorder %s22, 1
      %p122 = scmp.ne.s32.totalorder %s117, %s119
      %p123 = scmp.eq.s32.totalorder %s22, 0
      %p124 = por %p122, %p123
      %p125 = scmp.ne.s32.totalorder %s117, %s119
      %p126 = scmp.eq.s32.totalorder %s27, 1
      %p127 = por %p125, %p126
      %p128 = scmp.ne.s32.totalorder %s119, %s120
      %p129 = scmp.eq.s32.totalorder %s27, 0
      %p130 = por %p128, %p129
      %p131 = scmp.ne.s32.totalorder %s119, %s120
      %p132 = scmp.eq.s32.totalorder %s28, 1
      %p133 = por %p131, %p132
      %p135 = scmp.ne.s32.totalorder %s120, %s134
      %p136 = scmp.eq.s32.totalorder %s28, 0
      %p137 = por %p135, %p136
      %s139 = sadd.s32 %s138, 1
      %p142 = scmp.eq.s32.totalorder %s22, 1
      %p143 = scmp.ne.s32.totalorder %s138, %s140
      %p144 = scmp.eq.s32.totalorder %s22, 0
      %p145 = por %p143, %p144
      %p146 = scmp.ne.s32.totalorder %s138, %s140
      %p147 = scmp.eq.s32.totalorder %s27, 1
      %p148 = por %p146, %p147
      %p149 = scmp.ne.s32.totalorder %s140, %s141
      %p150 = scmp.eq.s32.totalorder %s27, 0
      %p151 = por %p149, %p150
      %p152 = scmp.ne.s32.totalorder %s140, %s141
      %p153 = scmp.eq.s32.totalorder %s28, 1
      %p154 = por %p152, %p153
      %p156 = scmp.ne.s32.totalorder %s141, %s155
      %p157 = scmp.eq.s32.totalorder %s28, 0
      %p158 = por %p156, %p157
      %s159 = ssub.s32 %s29, %s41
      %p160 = scmp.eq.s32.totalorder %s159, 0
      %s162 = sadd.s32 %s161, 1
      %s163 = scalar_select %p160, %s161, %s162
      %p166 = pneg %p160
      %p167 = scmp.eq.s32.totalorder %s22, 1
      %p168 = por %p166, %p167
      %p169 = scmp.ne.s32.totalorder %s161, %s164
      %p170 = scmp.eq.s32.totalorder %s22, 0
      %p171 = por %p169, %p170
      %p172 = scmp.ne.s32.totalorder %s161, %s164
      %p173 = scmp.eq.s32.totalorder %s27, 1
      %p174 = por %p172, %p173
      %p175 = scmp.ne.s32.totalorder %s164, %s165
      %p176 = scmp.eq.s32.totalorder %s27, 0
      %p177 = por %p175, %p176
      %p178 = scmp.ne.s32.totalorder %s164, %s165
      %p179 = scmp.eq.s32.totalorder %s28, 1
      %p180 = por %p178, %p179
      %p182 = scmp.ne.s32.totalorder %s165, %s181
      %p183 = scmp.eq.s32.totalorder %s28, 0
      %p184 = por %p182, %p183
      %s185 = ssub.s32 %s29, %s41
      %p186 = scmp.eq.s32.totalorder %s185, 0
      %s188 = sadd.s32 %s187, 1
      %s189 = scalar_select %p186, %s187, %s188
      %p192 = pneg %p186
      %p193 = scmp.eq.s32.totalorder %s22, 1
      %p194 = por %p192, %p193
      %p195 = scmp.ne.s32.totalorder %s187, %s190
      %p196 = scmp.eq.s32.totalorder %s22, 0
      %p197 = por %p195, %p196
      %p198 = scmp.ne.s32.totalorder %s187, %s190
      %p199 = scmp.eq.s32.totalorder %s27, 1
      %p200 = por %p198, %p199
      %p201 = scmp.ne.s32.totalorder %s190, %s191
      %p202 = scmp.eq.s32.totalorder %s27, 0
      %p203 = por %p201, %p202
      %p204 = scmp.ne.s32.totalorder %s190, %s191
      %p205 = scmp.eq.s32.totalorder %s28, 1
      %p206 = por %p204, %p205
      %p208 = scmp.ne.s32.totalorder %s191, %s207
      %p209 = scmp.eq.s32.totalorder %s28, 0
      %p210 = por %p208, %p209
      %s211 = ssub.s32 %s29, %s41
      %p212 = scmp.eq.s32.totalorder %s211, 0
      %s214 = sadd.s32 %s213, 1
      %s215 = scalar_select %p212, %s213, %s214
      %p218 = pneg %p212
      %p219 = scmp.eq.s32.totalorder %s22, 1
      %p220 = por %p218, %p219
      %p221 = scmp.ne.s32.totalorder %s213, %s216
      %p222 = scmp.eq.s32.totalorder %s22, 0
      %p223 = por %p221, %p222
      %p224 = scmp.ne.s32.totalorder %s213, %s216
      %p225 = scmp.eq.s32.totalorder %s27, 1
      %p226 = por %p224, %p225
      %p227 = scmp.ne.s32.totalorder %s216, %s217
      %p228 = scmp.eq.s32.totalorder %s27, 0
      %p229 = por %p227, %p228
      %p230 = scmp.ne.s32.totalorder %s216, %s217
      %p231 = scmp.eq.s32.totalorder %s28, 1
      %p232 = por %p230, %p231
      %p234 = scmp.ne.s32.totalorder %s217, %s233
      %p235 = scmp.eq.s32.totalorder %s28, 0
      %p236 = por %p234, %p235
      %p237 = scmp.le.s32.totalorder 1, %s22
      %p238 = scmp.lt.s32.totalorder %s22, 3
      %p239 = pnand %p237, %p238
      %p240 = pneg %p239
      // Predicated region
      $region9: #{tpu_custom_call.1} parent=5 // pred_check
        _
      $region10: #{tpu_custom_call.1} parent=5 // pred_check_branch
        %242 = sbr.rel (%p239) target = $region12
      $region11: #{tpu_custom_call.1} parent=5 // pred_region
        %s243 = ssub.s32 %s22, 1
        // Predicated region
        $region13: #{tpu_custom_call.1} parent=11 // pred_check
          %p244 = pneg %p109
        $region14: #{tpu_custom_call.1} parent=11 // pred_check_branch
          %246 = sbr.rel (%p244) target = $region16
        $region15: #{tpu_custom_call.1} parent=11 // pred_region
          _
        $region16: #{tpu_custom_call.1} parent=11 // pred_fallthru
          _
        // Predicated region
        $region17: #{tpu_custom_call.1} parent=11 // pred_check
          %p247 = pneg %p130
        $region18: #{tpu_custom_call.1} parent=11 // pred_check_branch
          %249 = sbr.rel (%p247) target = $region20
        $region19: #{tpu_custom_call.1} parent=11 // pred_region
          %s251 = ssub.s32 2048, 2048
          %252 = vsyncadd [#allocation6], %s251
          %s253 = sshll.u32 [#allocation7], 4
          %s254 = int_to_ptr.vmem [resolvable:$true] %s253
          %259 = dma.hbm_to_vmem [thread:$0]  %s3, 2048, %s254, [#allocation6], 128, 128, 8
        $region20: #{tpu_custom_call.1} parent=11 // pred_fallthru
          _
        // Predicated region
        $region21: #{tpu_custom_call.1} parent=11 // pred_check
          %p260 = pneg %p151
        $region22: #{tpu_custom_call.1} parent=11 // pred_check_branch
          %262 = sbr.rel (%p260) target = $region24
        $region23: #{tpu_custom_call.1} parent=11 // pred_region
          _
        $region24: #{tpu_custom_call.1} parent=11 // pred_fallthru
          _
      $region12: #{tpu_custom_call.1} parent=5 // pred_fallthru
        _
      %p263 = scmp.lt.s32.totalorder %s22, 2
      // Predicated region
      $region25: #{tpu_custom_call.1} parent=5 // pred_check
        %p264 = pneg %p263
      $region26: #{tpu_custom_call.1} parent=5 // pred_check_branch
        %266 = sbr.rel (%p264) target = $region28
      $region27: #{tpu_custom_call.1} parent=5 // pred_region
        // Predicated region
        $region29: #{tpu_custom_call.1} parent=27 // pred_check
          %p267 = pneg %p56
        $region30: #{tpu_custom_call.1} parent=27 // pred_check_branch
          %269 = sbr.rel (%p267) target = $region32
        $region31: #{tpu_custom_call.1} parent=27 // pred_region
          %s270 = sand.u32 %s46, 1
          %s271 = scalar_lea.sflag [#allocation3], %s270
          %s272 = sand.u32 %s46, 1
          %s273 = smul.addr %s272, 8
          %s274 = scalar_lea.vmem [#allocation2], %s273
          %s275 = smul.u32 4, %s30
          %s277 = ssub.s32 128, 128
          %278 = vsyncadd %s271, %s277
          %s279 = smul.addr %s29, 8
          %s280 = sadd.s32 %s275, %s279
          %s281 = smul.addr %s280, 32
          %s282 = scalar_lea.hbm %s0, %s281
          %s284 = sshll.u32 %s274, 4
          %s285 = int_to_ptr.vmem [resolvable:$true] %s284
          %287 = dma.hbm_to_vmem [thread:$0]  %s282, 128, %s285, %s271
        $region32: #{tpu_custom_call.1} parent=27 // pred_fallthru
          _
        // Predicated region
        $region33: #{tpu_custom_call.1} parent=27 // pred_check
          %p288 = pneg %p82
        $region34: #{tpu_custom_call.1} parent=27 // pred_check_branch
          %290 = sbr.rel (%p288) target = $region36
        $region35: #{tpu_custom_call.1} parent=27 // pred_region
          %s291 = sand.u32 %s22, 1
          %s292 = scalar_lea.sflag [#allocation6], %s291
          %s293 = sand.u32 %s72, 1
          %s294 = smul.addr %s293, 256
          %s295 = scalar_lea.vmem [#allocation5], %s294
          %s296 = smul.u32 64, %s30
          %s298 = ssub.s32 4096, 4096
          %299 = vsyncadd %s292, %s298
          %s300 = smul.addr %s296, 64
          %s301 = scalar_lea.hbm %s1, %s300
          %s302 = sshll.u32 %s295, 4
          %s303 = int_to_ptr.vmem [resolvable:$true] %s302
          %308 = dma.hbm_to_vmem [thread:$0]  %s301, 4096, %s303, %s292, 64, 64, 4
        $region36: #{tpu_custom_call.1} parent=27 // pred_fallthru
          _
      $region28: #{tpu_custom_call.1} parent=5 // pred_fallthru
        _
      %p309 = scmp.le.s32.totalorder 1, %s22
      %p310 = scmp.lt.s32.totalorder %s22, 3
      %p311 = pnand %p309, %p310
      %p312 = pneg %p311
      // Predicated region
      $region37: #{tpu_custom_call.1} parent=5 // pred_check
        _
      $region38: #{tpu_custom_call.1} parent=5 // pred_check_branch
        %314 = sbr.rel (%p311) target = $region40
      $region39: #{tpu_custom_call.1} parent=5 // pred_region
        %s315 = ssub.s32 %s22, 1
        %s316 = sand.u32 %s49, 1
        %s317 = scalar_lea.sflag [#allocation3], %s316
        %s318 = sand.u32 %s49, 1
        %s319 = smul.addr %s318, 8
        %s320 = scalar_lea.vmem [#allocation2], %s319
        // Predicated region
        $region41: #{tpu_custom_call.1} parent=39 // pred_check
          %p321 = pneg %p62
        $region42: #{tpu_custom_call.1} parent=39 // pred_check_branch
          %323 = sbr.rel (%p321) target = $region44
        $region43: #{tpu_custom_call.1} parent=39 // pred_region
          %324 = dma.done %s317, 128
        $region44: #{tpu_custom_call.1} parent=39 // pred_fallthru
          _
        %s325 = sand.u32 %s27, 1
        %s326 = scalar_lea.sflag [#allocation6], %s325
        %s327 = sand.u32 %s75, 1
        %s328 = smul.addr %s327, 256
        %s329 = scalar_lea.vmem [#allocation5], %s328
        // Predicated region
        $region45: #{tpu_custom_call.1} parent=39 // pred_check
          %p330 = pneg %p88
        $region46: #{tpu_custom_call.1} parent=39 // pred_check_branch
          %332 = sbr.rel (%p330) target = $region48
        $region47: #{tpu_custom_call.1} parent=39 // pred_region
          %333 = dma.done %s326, 4096
        $region48: #{tpu_custom_call.1} parent=39 // pred_fallthru
          _
        // Predicated region
        $region49: #{tpu_custom_call.1} parent=39 // pred_check
          %p334 = pneg %p130
        $region50: #{tpu_custom_call.1} parent=39 // pred_check_branch
          %336 = sbr.rel (%p334) target = $region52
        $region51: #{tpu_custom_call.1} parent=39 // pred_region
          %337 = dma.done [#allocation6], 2048
        $region52: #{tpu_custom_call.1} parent=39 // pred_fallthru
          _
        %s338 = sand.u32 %s49, 1
        %s339 = scalar_lea.sflag [#allocation3], %s338
        %s340 = sand.u32 %s49, 1
        %s341 = smul.addr %s340, 8
        %s342 = scalar_lea.vmem [#allocation2], %s341
        %p343 = pneg %p62
        %p344 = pneg %p59
        %s345 = sand.u32 %s27, 1
        %s346 = scalar_lea.sflag [#allocation6], %s345
        %s347 = sand.u32 %s75, 1
        %s348 = smul.addr %s347, 256
        %s349 = scalar_lea.vmem [#allocation5], %s348
        %p350 = pneg %p88
        %p351 = pneg %p85
        %p352 = pneg %p109
        %p353 = pneg %p106
        %p354 = pneg %p130
        %p355 = pneg %p127
        %p356 = pneg %p151
        %p357 = pneg %p148
        %p358 = pneg %p177
        %p359 = pneg %p174
        %p360 = pneg %p203
        %p361 = pneg %p200
        %p362 = pneg %p229
        %p363 = pneg %p226
        %s364 = smul.u32 4, %s32
        %s365 = smul.u32 64, %s32
        %s367 = smul.u32 %s31, 2
        %p368 = scmp.eq.s32.totalorder %s32, 0
        // Predicated region
        $region53: #{tpu_custom_call.1} parent=39 // pred_check
          %p369 = pneg %p368
        $region54: #{tpu_custom_call.1} parent=39 // pred_check_branch
          %371 = sbr.rel (%p369) target = $region56
        $region55: #{tpu_custom_call.1} parent=39 // pred_region
          %372 = vst [vmem:[#allocation8] sm:$0x3] 0.0
        $region56: #{tpu_custom_call.1} parent=39 // pred_fallthru
          _
        %v373 = vld [vmem:[%s320] sm:$0xff]
        %v374 = vld [vmem:[#allocation8] sm:$0x3]
        %v376 = vcombine.high %v373, %v373
        %v378 = vunpack.c.l.s4 1983009808
        %v379 = vunpack.c.0.s8 %v378
        %v380 = vlaneseq
        %v381 = vshrl.u32 %v380, 7
        %v382 = vsub.s32 %v379, %v381
        %v383 = vrot.slane %v373, %v382
        %v385 = vunpack.c.l.s4 1983009808
        %v386 = vunpack.c.0.s8 %v385
        %v387 = vlaneseq
        %v388 = vshrl.u32 %v387, 7
        %v389 = vsub.s32 %v386, %v388
        %v390 = vrot.slane %v376, %v389
        %v391 = vcombine.high %v383, %v383
        %v392 = vcombine.high %v390, %v390
        %v397 = vpack.c.bf16 %v383, %v383
        %v398 = vpack.c.bf16 %v391, %v391
        %v399 = vpack.c.bf16 %v390, %v390
        %v400 = vpack.c.bf16 %v392, %v392
        %v401 = vld [vmem:[%s329] sm:$0xf]
        %v402 = vld [vmem:[%s329 + $0x4] sm:$0xf]
        %v403 = vld [vmem:[%s329 + $0x8] sm:$0xf]
        %v404 = vld [vmem:[%s329 + $0xc] sm:$0xf]
        %v405 = vld [vmem:[%s329 + $0x10] sm:$0xf]
        %v406 = vld [vmem:[%s329 + $0x14] sm:$0xf]
        %v407 = vld [vmem:[%s329 + $0x18] sm:$0xf]
        %v408 = vld [vmem:[%s329 + $0x1c] sm:$0xf]
        %v409 = vld [vmem:[%s329 + $0x20] sm:$0xf]
        %v410 = vld [vmem:[%s329 + $0x24] sm:$0xf]
        %v411 = vld [vmem:[%s329 + $0x28] sm:$0xf]
        %v412 = vld [vmem:[%s329 + $0x2c] sm:$0xf]
        %v413 = vld [vmem:[%s329 + $0x30] sm:$0xf]
        %v414 = vld [vmem:[%s329 + $0x34] sm:$0xf]
        %v415 = vld [vmem:[%s329 + $0x38] sm:$0xf]
        %v416 = vld [vmem:[%s329 + $0x3c] sm:$0xf]
        %v417 = vld [vmem:[%s329 + $0x40] sm:$0xf]
        %v418 = vld [vmem:[%s329 + $0x44] sm:$0xf]
        %v419 = vld [vmem:[%s329 + $0x48] sm:$0xf]
        %v420 = vld [vmem:[%s329 + $0x4c] sm:$0xf]
        %v421 = vld [vmem:[%s329 + $0x50] sm:$0xf]
        %v422 = vld [vmem:[%s329 + $0x54] sm:$0xf]
        %v423 = vld [vmem:[%s329 + $0x58] sm:$0xf]
        %v424 = vld [vmem:[%s329 + $0x5c] sm:$0xf]
        %v425 = vld [vmem:[%s329 + $0x60] sm:$0xf]
        %v426 = vld [vmem:[%s329 + $0x64] sm:$0xf]
        %v427 = vld [vmem:[%s329 + $0x68] sm:$0xf]
        %v428 = vld [vmem:[%s329 + $0x6c] sm:$0xf]
        %v429 = vld [vmem:[%s329 + $0x70] sm:$0xf]
        %v430 = vld [vmem:[%s329 + $0x74] sm:$0xf]
        %v431 = vld [vmem:[%s329 + $0x78] sm:$0xf]
        %v432 = vld [vmem:[%s329 + $0x7c] sm:$0xf]
        %v433 = vld [vmem:[%s329 + $0x80] sm:$0xf]
        %v434 = vld [vmem:[%s329 + $0x84] sm:$0xf]
        %v435 = vld [vmem:[%s329 + $0x88] sm:$0xf]
        %v436 = vld [vmem:[%s329 + $0x8c] sm:$0xf]
        %v437 = vld [vmem:[%s329 + $0x90] sm:$0xf]
        %v438 = vld [vmem:[%s329 + $0x94] sm:$0xf]
        %v439 = vld [vmem:[%s329 + $0x98] sm:$0xf]
        %v440 = vld [vmem:[%s329 + $0x9c] sm:$0xf]
        %v441 = vld [vmem:[%s329 + $0xa0] sm:$0xf]
        %v442 = vld [vmem:[%s329 + $0xa4] sm:$0xf]
        %v443 = vld [vmem:[%s329 + $0xa8] sm:$0xf]
        %v444 = vld [vmem:[%s329 + $0xac] sm:$0xf]
        %v445 = vld [vmem:[%s329 + $0xb0] sm:$0xf]
        %v446 = vld [vmem:[%s329 + $0xb4] sm:$0xf]
        %v447 = vld [vmem:[%s329 + $0xb8] sm:$0xf]
        %v448 = vld [vmem:[%s329 + $0xbc] sm:$0xf]
        %v449 = vld [vmem:[%s329 + $0xc0] sm:$0xf]
        %v450 = vld [vmem:[%s329 + $0xc4] sm:$0xf]
        %v451 = vld [vmem:[%s329 + $0xc8] sm:$0xf]
        %v452 = vld [vmem:[%s329 + $0xcc] sm:$0xf]
        %v453 = vld [vmem:[%s329 + $0xd0] sm:$0xf]
        %v454 = vld [vmem:[%s329 + $0xd4] sm:$0xf]
        %v455 = vld [vmem:[%s329 + $0xd8] sm:$0xf]
        %v456 = vld [vmem:[%s329 + $0xdc] sm:$0xf]
        %v457 = vld [vmem:[%s329 + $0xe0] sm:$0xf]
        %v458 = vld [vmem:[%s329 + $0xe4] sm:$0xf]
        %v459 = vld [vmem:[%s329 + $0xe8] sm:$0xf]
        %v460 = vld [vmem:[%s329 + $0xec] sm:$0xf]
        %v461 = vld [vmem:[%s329 + $0xf0] sm:$0xf]
        %v462 = vld [vmem:[%s329 + $0xf4] sm:$0xf]
        %v463 = vld [vmem:[%s329 + $0xf8] sm:$0xf]
        %v464 = vld [vmem:[%s329 + $0xfc] sm:$0xf]
        %v529 = vunpack.c.l.b16 %v401
        %v530 = vunpack.c.l.b16 %v402
        %v531 = vunpack.c.l.b16 %v403
        %v532 = vunpack.c.l.b16 %v404
        %v533 = vunpack.c.l.b16 %v405
        %v534 = vunpack.c.l.b16 %v406
        %v535 = vunpack.c.l.b16 %v407
        %v536 = vunpack.c.l.b16 %v408
        %v537 = vunpack.c.l.b16 %v409
        %v538 = vunpack.c.l.b16 %v410
        %v539 = vunpack.c.l.b16 %v411
        %v540 = vunpack.c.l.b16 %v412
        %v541 = vunpack.c.l.b16 %v413
        %v542 = vunpack.c.l.b16 %v414
        %v543 = vunpack.c.l.b16 %v415
        %v544 = vunpack.c.l.b16 %v416
        %v545 = vunpack.c.l.b16 %v417
        %v546 = vunpack.c.l.b16 %v418
        %v547 = vunpack.c.l.b16 %v419
        %v548 = vunpack.c.l.b16 %v420
        %v549 = vunpack.c.l.b16 %v421
        %v550 = vunpack.c.l.b16 %v422
        %v551 = vunpack.c.l.b16 %v423
        %v552 = vunpack.c.l.b16 %v424
        %v553 = vunpack.c.l.b16 %v425
        %v554 = vunpack.c.l.b16 %v426
        %v555 = vunpack.c.l.b16 %v427
        %v556 = vunpack.c.l.b16 %v428
        %v557 = vunpack.c.l.b16 %v429
        %v558 = vunpack.c.l.b16 %v430
        %v559 = vunpack.c.l.b16 %v431
        %v560 = vunpack.c.l.b16 %v432
        %v561 = vunpack.c.l.b16 %v433
        %v562 = vunpack.c.l.b16 %v434
        %v563 = vunpack.c.l.b16 %v435
        %v564 = vunpack.c.l.b16 %v436
        %v565 = vunpack.c.l.b16 %v437
        %v566 = vunpack.c.l.b16 %v438
        %v567 = vunpack.c.l.b16 %v439
        %v568 = vunpack.c.l.b16 %v440
        %v569 = vunpack.c.l.b16 %v441
        %v570 = vunpack.c.l.b16 %v442
        %v571 = vunpack.c.l.b16 %v443
        %v572 = vunpack.c.l.b16 %v444
        %v573 = vunpack.c.l.b16 %v445
        %v574 = vunpack.c.l.b16 %v446
        %v575 = vunpack.c.l.b16 %v447
        %v576 = vunpack.c.l.b16 %v448
        %v577 = vunpack.c.l.b16 %v449
        %v578 = vunpack.c.l.b16 %v450
        %v579 = vunpack.c.l.b16 %v451
        %v580 = vunpack.c.l.b16 %v452
        %v581 = vunpack.c.l.b16 %v453
        %v582 = vunpack.c.l.b16 %v454
        %v583 = vunpack.c.l.b16 %v455
        %v584 = vunpack.c.l.b16 %v456
        %v585 = vunpack.c.l.b16 %v457
        %v586 = vunpack.c.l.b16 %v458
        %v587 = vunpack.c.l.b16 %v459
        %v588 = vunpack.c.l.b16 %v460
        %v589 = vunpack.c.l.b16 %v461
        %v590 = vunpack.c.l.b16 %v462
        %v591 = vunpack.c.l.b16 %v463
        %v592 = vunpack.c.l.b16 %v464
        %v593 = vpack.c.b16 %v530, %v529
        %v594 = vpack.c.b16 %v532, %v531
        %v595 = vpack.c.b16 %v534, %v533
        %v596 = vpack.c.b16 %v536, %v535
        %v597 = vpack.c.b16 %v538, %v537
        %v598 = vpack.c.b16 %v540, %v539
        %v599 = vpack.c.b16 %v542, %v541
        %v600 = vpack.c.b16 %v544, %v543
        %v601 = vpack.c.b16 %v546, %v545
        %v602 = vpack.c.b16 %v548, %v547
        %v603 = vpack.c.b16 %v550, %v549
        %v604 = vpack.c.b16 %v552, %v551
        %v605 = vpack.c.b16 %v554, %v553
        %v606 = vpack.c.b16 %v556, %v555
        %v607 = vpack.c.b16 %v558, %v557
        %v608 = vpack.c.b16 %v560, %v559
        %v609 = vpack.c.b16 %v562, %v561
        %v610 = vpack.c.b16 %v564, %v563
        %v611 = vpack.c.b16 %v566, %v565
        %v612 = vpack.c.b16 %v568, %v567
        %v613 = vpack.c.b16 %v570, %v569
        %v614 = vpack.c.b16 %v572, %v571
        %v615 = vpack.c.b16 %v574, %v573
        %v616 = vpack.c.b16 %v576, %v575
        %v617 = vpack.c.b16 %v578, %v577
        %v618 = vpack.c.b16 %v580, %v579
        %v619 = vpack.c.b16 %v582, %v581
        %v620 = vpack.c.b16 %v584, %v583
        %v621 = vpack.c.b16 %v586, %v585
        %v622 = vpack.c.b16 %v588, %v587
        %v623 = vpack.c.b16 %v590, %v589
        %v624 = vpack.c.b16 %v592, %v591
        %657 = vmatprep.subr.bf16.mxu0 0
        %658 = vmatpush1.bf16.msra.mxu0 %v593
        %659 = vmatprep.subr.bf16.mxu0 0
        %660 = vmatpush1.bf16.msra.mxu0 %v594
        %661 = vmatprep.subr.bf16.mxu0 0
        %662 = vmatpush1.bf16.msra.mxu0 %v595
        %663 = vmatprep.subr.bf16.mxu0 0
        %664 = vmatpush1.bf16.msra.mxu0 %v596
        %665 = vmatprep.subr.bf16.mxu0 0
        %666 = vmatpush1.bf16.msra.mxu0 %v597
        %667 = vmatprep.subr.bf16.mxu0 0
        %668 = vmatpush1.bf16.msra.mxu0 %v598
        %669 = vmatprep.subr.bf16.mxu0 0
        %670 = vmatpush1.bf16.msra.mxu0 %v599
        %671 = vmatprep.subr.bf16.mxu0 0
        %672 = vmatpush1.bf16.msra.mxu0 %v600
        %673 = vmatprep.subr.bf16.mxu0 0
        %674 = vmatpush1.bf16.msra.mxu0 %v601
        %675 = vmatprep.subr.bf16.mxu0 0
        %676 = vmatpush1.bf16.msra.mxu0 %v602
        %677 = vmatprep.subr.bf16.mxu0 0
        %678 = vmatpush1.bf16.msra.mxu0 %v603
        %679 = vmatprep.subr.bf16.mxu0 0
        %680 = vmatpush1.bf16.msra.mxu0 %v604
        %681 = vmatprep.subr.bf16.mxu0 0
        %682 = vmatpush1.bf16.msra.mxu0 %v605
        %683 = vmatprep.subr.bf16.mxu0 0
        %684 = vmatpush1.bf16.msra.mxu0 %v606
        %685 = vmatprep.subr.bf16.mxu0 0
        %686 = vmatpush1.bf16.msra.mxu0 %v607
        %687 = vmatprep.subr.bf16.mxu0 0
        %688 = vmatpush1.bf16.msra.mxu0 %v608
        %689 = vmatprep.mubr.bf16.mxu0 %v398
        %690 = vmatmul.mubr.bf16.gmra.mrb[0].mxu0 %v397
        %v691 = vpop.f32.mrb[0].mxu0
        %v692 = vadd.f32 0.0, %v691
        %v693 = vpop.f32.mrb[0].mxu0
        %v694 = vpop.f32.mrb[0].mxu0
        %v695 = vpop.f32.mrb[0].mxu0
        %696 = vdwg.mxu0
        %697 = vmatprep.subr.bf16.mxu0 0
        %698 = vmatpush1.bf16.msra.mxu0 %v609
        %699 = vmatprep.subr.bf16.mxu0 0
        %700 = vmatpush1.bf16.msra.mxu0 %v610
        %701 = vmatprep.subr.bf16.mxu0 0
        %702 = vmatpush1.bf16.msra.mxu0 %v611
        %703 = vmatprep.subr.bf16.mxu0 0
        %704 = vmatpush1.bf16.msra.mxu0 %v612
        %705 = vmatprep.subr.bf16.mxu0 0
        %706 = vmatpush1.bf16.msra.mxu0 %v613
        %707 = vmatprep.subr.bf16.mxu0 0
        %708 = vmatpush1.bf16.msra.mxu0 %v614
        %709 = vmatprep.subr.bf16.mxu0 0
        %710 = vmatpush1.bf16.msra.mxu0 %v615
        %711 = vmatprep.subr.bf16.mxu0 0
        %712 = vmatpush1.bf16.msra.mxu0 %v616
        %713 = vmatprep.subr.bf16.mxu0 0
        %714 = vmatpush1.bf16.msra.mxu0 %v617
        %715 = vmatprep.subr.bf16.mxu0 0
        %716 = vmatpush1.bf16.msra.mxu0 %v618
        %717 = vmatprep.subr.bf16.mxu0 0
        %718 = vmatpush1.bf16.msra.mxu0 %v619
        %719 = vmatprep.subr.bf16.mxu0 0
        %720 = vmatpush1.bf16.msra.mxu0 %v620
        %721 = vmatprep.subr.bf16.mxu0 0
        %722 = vmatpush1.bf16.msra.mxu0 %v621
        %723 = vmatprep.subr.bf16.mxu0 0
        %724 = vmatpush1.bf16.msra.mxu0 %v622
        %725 = vmatprep.subr.bf16.mxu0 0
        %726 = vmatpush1.bf16.msra.mxu0 %v623
        %727 = vmatprep.subr.bf16.mxu0 0
        %728 = vmatpush1.bf16.msra.mxu0 %v624
        %729 = vmatprep.mubr.bf16.mxu0 %v400
        %730 = vmatmul.mubr.bf16.gmra.mrb[0].mxu0 %v399
        %v731 = vpop.f32.mrb[0].mxu0
        %v732 = vadd.f32 %v692, %v731
        %v733 = vpop.f32.mrb[0].mxu0
        %v734 = vpop.f32.mrb[0].mxu0
        %v735 = vpop.f32.mrb[0].mxu0
        %736 = vdwg.mxu0
        %v737 = vadd.f32 %v374, %v732
        %738 = vst [vmem:[#allocation8] sm:$0x3] %v737
        %p739 = scmp.eq.s32.totalorder %s32, 1
        // Predicated region
        $region57: #{tpu_custom_call.1} parent=39 // pred_check
          %p740 = pneg %p739
        $region58: #{tpu_custom_call.1} parent=39 // pred_check_branch
          %742 = sbr.rel (%p740) target = $region60
        $region59: #{tpu_custom_call.1} parent=39 // pred_region
          %v743 = vld [vmem:[#allocation8] sm:$0x3]
          %v744 = vld [vmem:[%s2] sm:$0x1]
          %v746 = vlaneseq
          %v747 = vshrl.u32 %v746, 7
          %v748 = vsub.s32 0, %v747
          %v749 = vrot.slane %v744, %v748
          %v751 = vadd.f32 %v743, %v749
          %v752 = vmax.f32 %v751, 0.0
          %753 = vst [vmem:[#allocation8] sm:$0x3] %v752
          %v754 = vpack.c.bf16 %v752, %v752
          %v755 = vld [vmem:[#allocation7] sm:$0xff]
          %v756 = vld [vmem:[#allocation7 + $0x8] sm:$0xff]
          %v757 = vld [vmem:[#allocation7 + $0x10] sm:$0xff]
          %v758 = vld [vmem:[#allocation7 + $0x18] sm:$0xff]
          %v759 = vld [vmem:[#allocation7 + $0x20] sm:$0xff]
          %v760 = vld [vmem:[#allocation7 + $0x28] sm:$0xff]
          %v761 = vld [vmem:[#allocation7 + $0x30] sm:$0xff]
          %v762 = vld [vmem:[#allocation7 + $0x38] sm:$0xff]
          %v763 = vld [vmem:[#allocation7 + $0x40] sm:$0xff]
          %v764 = vld [vmem:[#allocation7 + $0x48] sm:$0xff]
          %v765 = vld [vmem:[#allocation7 + $0x50] sm:$0xff]
          %v766 = vld [vmem:[#allocation7 + $0x58] sm:$0xff]
          %v767 = vld [vmem:[#allocation7 + $0x60] sm:$0xff]
          %v768 = vld [vmem:[#allocation7 + $0x68] sm:$0xff]
          %v769 = vld [vmem:[#allocation7 + $0x70] sm:$0xff]
          %v770 = vld [vmem:[#allocation7 + $0x78] sm:$0xff]
          %v771 = vld [vmem:[%s4] sm:$0x3]
          %v773 = vlaneseq
          %v774 = vshrl.u32 %v773, 7
          %v775 = vsub.s32 0, %v774
          %v776 = vrot.slane %v771, %v775
          %v777 = vlaneseq
          %v778 = vshrl.u32 %v777, 7
          %v779 = vsub.s32 1, %v778
          %v780 = vrot.slane %v771, %v779
          %v799 = vunpack.c.l.b16 %v755
          %v800 = vunpack.c.h.b16 %v755
          %v801 = vunpack.c.l.b16 %v756
          %v802 = vunpack.c.h.b16 %v756
          %v803 = vunpack.c.l.b16 %v757
          %v804 = vunpack.c.h.b16 %v757
          %v805 = vunpack.c.l.b16 %v758
          %v806 = vunpack.c.h.b16 %v758
          %v807 = vunpack.c.l.b16 %v759
          %v808 = vunpack.c.h.b16 %v759
          %v809 = vunpack.c.l.b16 %v760
          %v810 = vunpack.c.h.b16 %v760
          %v811 = vunpack.c.l.b16 %v761
          %v812 = vunpack.c.h.b16 %v761
          %v813 = vunpack.c.l.b16 %v762
          %v814 = vunpack.c.h.b16 %v762
          %v815 = vunpack.c.l.b16 %v763
          %v816 = vunpack.c.h.b16 %v763
          %v817 = vunpack.c.l.b16 %v764
          %v818 = vunpack.c.h.b16 %v764
          %v819 = vunpack.c.l.b16 %v765
          %v820 = vunpack.c.h.b16 %v765
          %v821 = vunpack.c.l.b16 %v766
          %v822 = vunpack.c.h.b16 %v766
          %v823 = vunpack.c.l.b16 %v767
          %v824 = vunpack.c.h.b16 %v767
          %v825 = vunpack.c.l.b16 %v768
          %v826 = vunpack.c.h.b16 %v768
          %v827 = vunpack.c.l.b16 %v769
          %v828 = vunpack.c.h.b16 %v769
          %v829 = vunpack.c.l.b16 %v770
          %v830 = vunpack.c.h.b16 %v770
          %v831 = vpack.c.b16 %v801, %v799
          %v832 = vpack.c.b16 %v802, %v800
          %v833 = vpack.c.b16 %v805, %v803
          %v834 = vpack.c.b16 %v806, %v804
          %v835 = vpack.c.b16 %v809, %v807
          %v836 = vpack.c.b16 %v810, %v808
          %v837 = vpack.c.b16 %v813, %v811
          %v838 = vpack.c.b16 %v814, %v812
          %v839 = vpack.c.b16 %v817, %v815
          %v840 = vpack.c.b16 %v818, %v816
          %v841 = vpack.c.b16 %v821, %v819
          %v842 = vpack.c.b16 %v822, %v820
          %v843 = vpack.c.b16 %v825, %v823
          %v844 = vpack.c.b16 %v826, %v824
          %v845 = vpack.c.b16 %v829, %v827
          %v846 = vpack.c.b16 %v830, %v828
          %863 = vmatprep.subr.bf16.mxu0 %v832
          %864 = vmatpush1.bf16.msra.mxu0 %v831
          %865 = vmatprep.subr.bf16.mxu0 %v834
          %866 = vmatpush1.bf16.msra.mxu0 %v833
          %867 = vmatprep.subr.bf16.mxu0 %v836
          %868 = vmatpush1.bf16.msra.mxu0 %v835
          %869 = vmatprep.subr.bf16.mxu0 %v838
          %870 = vmatpush1.bf16.msra.mxu0 %v837
          %871 = vmatprep.subr.bf16.mxu0 %v840
          %872 = vmatpush1.bf16.msra.mxu0 %v839
          %873 = vmatprep.subr.bf16.mxu0 %v842
          %874 = vmatpush1.bf16.msra.mxu0 %v841
          %875 = vmatprep.subr.bf16.mxu0 %v844
          %876 = vmatpush1.bf16.msra.mxu0 %v843
          %877 = vmatprep.subr.bf16.mxu0 %v846
          %878 = vmatpush1.bf16.msra.mxu0 %v845
          %879 = vmatprep.subr.bf16.mxu0 0
          %880 = vmatpush1.bf16.msra.mxu0 0
          %881 = vmatprep.subr.bf16.mxu0 0
          %882 = vmatpush1.bf16.msra.mxu0 0
          %883 = vmatprep.subr.bf16.mxu0 0
          %884 = vmatpush1.bf16.msra.mxu0 0
          %885 = vmatprep.subr.bf16.mxu0 0
          %886 = vmatpush1.bf16.msra.mxu0 0
          %887 = vmatprep.subr.bf16.mxu0 0
          %888 = vmatpush1.bf16.msra.mxu0 0
          %889 = vmatprep.subr.bf16.mxu0 0
          %890 = vmatpush1.bf16.msra.mxu0 0
          %891 = vmatprep.subr.bf16.mxu0 0
          %892 = vmatpush1.bf16.msra.mxu0 0
          %893 = vmatprep.subr.bf16.mxu0 0
          %894 = vmatpush1.bf16.msra.mxu0 0
          %895 = vmatprep.mubr.bf16.mxu0 0
          %896 = vmatmul.mubr.bf16.gmra.mrb[0].mxu0 %v754
          %v897 = vpop.f32.mrb[0].mxu0
          %v898 = vadd.f32 %v776, %v897
          %v899 = vpop.f32.mrb[0].mxu0
          %v900 = vadd.f32 %v780, %v899
          %v901 = vpop.f32.mrb[0].mxu0
          %v902 = vpop.f32.mrb[0].mxu0
          %903 = vdwg.mxu0
          %904 = vst [vmem:[#allocation9] sm:$0x3] %v898
          %v905 = vmul.f32 %v898, %v898
          %vm906 = vcmask 1041408
          %v907 = vsel %vm906, %v905, 0.0
          %908 = vadd.xlane.f32.xlu0 %v907
          %v909 = vpop.xlane.xlu0 %908
          %v910 = vadd.f32 %v909, 1e-12
          %v911 = vrsqrt.pop %v910
          %v912 = vmul.f32 %v898, %v911
          %v913 = vmul.f32 %v900, %v900
          %v914 = vsel %vm906, %v913, 0.0
          %915 = vadd.xlane.f32.xlu0 %v914
          %v916 = vpop.xlane.xlu0 %915
          %v917 = vadd.f32 %v916, 1e-12
          %v918 = vrsqrt.pop %v917
          %v919 = vmul.f32 %v900, %v918
          %v920 = vmul.f32 %v912, %v919
          %v921 = vsel %vm906, %v920, 0.0
          %922 = vadd.xlane.f32.xlu0 %v921
          %v923 = vpop.xlane.xlu0 %922
          %v924 = vmul.f32 %v923, 2.0
          %v925 = vsub.f32 2.0, %v924
          %v926 = vlaneseq
          %v927 = vshrl.u32 %v926, 7
          %v928 = vstv %s367
          %v929 = vadd.s32 %v928, %v927
          %vm930 = vcmp.lt.s32.totalorder %v929, 2
          %v931 = vsel %vm930, %v925, 0.0
          %vm932 = vcmask 1024
          %v933 = vsel %vm932, %v931, 0.0
          %934 = vadd.xlane.f32.xlu0 %v933
          %v935 = vpop.xlane.xlu0 %934
          %v936 = vrot.slane %v935, 4
          %v937 = vadd.f32 %v935, %v936
          %v938 = vrot.slane %v937, 2
          %v939 = vadd.f32 %v937, %v938
          %v940 = vrot.slane %v939, 1
          %v941 = vadd.f32 %v939, %v940
          %s942 = vtos %v941
          %v943 = vstv %s942
          %944 = vst [vmem:[#allocation11] sm:$0xff] %v943
        $region60: #{tpu_custom_call.1} parent=39 // pred_fallthru
          _
        // Predicated region
        $region61: #{tpu_custom_call.1} parent=39 // pred_check
          %p945 = pneg %p174
        $region62: #{tpu_custom_call.1} parent=39 // pred_check_branch
          %947 = sbr.rel (%p945) target = $region64
        $region63: #{tpu_custom_call.1} parent=39 // pred_region
          %s949 = ssub.s32 32, 32
          %950 = vsyncadd [#allocation4], %s949
          %s951 = smul.addr %s31, 32
          %s952 = scalar_lea.hbm %s5, %s951
          %s954 = sshll.u32 [#allocation8], 4
          %s955 = int_to_ptr.vmem [resolvable:$true] %s954
          %957 = dma.vmem_to_hbm [thread:$0]  %s955, 32, %s952, [#allocation4]
        $region64: #{tpu_custom_call.1} parent=39 // pred_fallthru
          _
        // Predicated region
        $region65: #{tpu_custom_call.1} parent=39 // pred_check
          %p958 = pneg %p200
        $region66: #{tpu_custom_call.1} parent=39 // pred_check_branch
          %960 = sbr.rel (%p958) target = $region68
        $region67: #{tpu_custom_call.1} parent=39 // pred_region
          %s962 = ssub.s32 32, 32
          %963 = vsyncadd [#allocation10], %s962
          %s964 = smul.addr %s31, 32
          %s965 = scalar_lea.hbm %s6, %s964
          %s967 = sshll.u32 [#allocation9], 4
          %s968 = int_to_ptr.vmem [resolvable:$true] %s967
          %970 = dma.vmem_to_hbm [thread:$0]  %s968, 32, %s965, [#allocation10]
        $region68: #{tpu_custom_call.1} parent=39 // pred_fallthru
          _
        // Predicated region
        $region69: #{tpu_custom_call.1} parent=39 // pred_check
          %p971 = pneg %p226
        $region70: #{tpu_custom_call.1} parent=39 // pred_check_branch
          %973 = sbr.rel (%p971) target = $region72
        $region71: #{tpu_custom_call.1} parent=39 // pred_region
          %s975 = ssub.s32 128, 128
          %976 = vsyncadd [#allocation10], %s975
          %s977 = smul.addr %s31, 128
          %s978 = scalar_lea.hbm %s7, %s977
          %s980 = sshll.u32 [#allocation11], 4
          %s981 = int_to_ptr.vmem [resolvable:$true] %s980
          %983 = dma.vmem_to_hbm [thread:$0]  %s981, 128, %s978, [#allocation10]
        $region72: #{tpu_custom_call.1} parent=39 // pred_fallthru
          _
        // Predicated region
        $region73: #{tpu_custom_call.1} parent=39 // pred_check
          %p984 = pneg %p174
        $region74: #{tpu_custom_call.1} parent=39 // pred_check_branch
          %986 = sbr.rel (%p984) target = $region76
        $region75: #{tpu_custom_call.1} parent=39 // pred_region
          %987 = dma.done [#allocation4], 32
        $region76: #{tpu_custom_call.1} parent=39 // pred_fallthru
          _
        // Predicated region
        $region77: #{tpu_custom_call.1} parent=39 // pred_check
          %p988 = pneg %p200
        $region78: #{tpu_custom_call.1} parent=39 // pred_check_branch
          %990 = sbr.rel (%p988) target = $region80
        $region79: #{tpu_custom_call.1} parent=39 // pred_region
          %991 = dma.done [#allocation10], 32
        $region80: #{tpu_custom_call.1} parent=39 // pred_fallthru
          _
        // Predicated region
        $region81: #{tpu_custom_call.1} parent=39 // pred_check
          %p992 = pneg %p226
        $region82: #{tpu_custom_call.1} parent=39 // pred_check_branch
          %994 = sbr.rel (%p992) target = $region84
        $region83: #{tpu_custom_call.1} parent=39 // pred_region
          %995 = dma.done [#allocation10], 128
        $region84: #{tpu_custom_call.1} parent=39 // pred_fallthru
          _
      $region40: #{tpu_custom_call.1} parent=5 // pred_fallthru
        _
      %p996 = scmp.le.s32.totalorder 2, %s22
      // Predicated region
      $region85: #{tpu_custom_call.1} parent=5 // pred_check
        %p997 = pneg %p996
      $region86: #{tpu_custom_call.1} parent=5 // pred_check_branch
        %999 = sbr.rel (%p997) target = $region88
      $region87: #{tpu_custom_call.1} parent=5 // pred_region
        %s1000 = ssub.s32 %s22, 2
      $region88: #{tpu_custom_call.1} parent=5 // pred_fallthru
        _
    $region6: #{tpu_custom_call.1} parent=1 // loop_footer
      %s26 = sadd.s32 1, %s22
    $region7: #{tpu_custom_call.1} parent=1 // loop_footer_branch
      %21 = sbr.rel target = $region3
    $region8: #{tpu_custom_call.1} parent=1 // loop_exit
      _
    %1001 = vsyncpa [#allocation3], 1
    %s1002 = scalar_lea.sflag [#allocation3], 1
    %1003 = vsyncpa %s1002, 1
    %1004 = vsyncpa [#allocation6], 1
    %s1005 = scalar_lea.sflag [#allocation6], 1
    %1006 = vsyncpa %s1005, 1
    %1007 = vsyncpa [#allocation4], 1
    %s1008 = scalar_lea.sflag [#allocation4], 1
    %1009 = vsyncpa %s1008, 1
    %1010 = vsyncpa [#allocation10], 1

</llo_original>
